<compile_context>
chip_gen: v5e
topology: v5e:2x2
jax: 0.10.0
libtpu: 0.0.40
codegen_flags: <defaults>
</compile_context>

<pallas_src>
import functools

import numpy as np

import jax
import jax.numpy as jnp
from jax.experimental import pallas as pl
from jax.experimental.pallas import tpu as pltpu


# ---------------------------------------------------------------------------
# Kernel
# ---------------------------------------------------------------------------
def _decomp_kernel(a_ref, x_ref, res_ref, mean_ref):
    # a_ref:           (L, L)      resident averaging matrix (constant block index).
    # x_ref/res/mean:  (BB, L, TC) one (batch-tile, channel-tile) block.
    a = a_ref[...]                                   # hoisted: one VMEM load per step
    for b in range(x_ref.shape[0]):                  # small static unroll over BB
        xb = x_ref[b]                                # (L, TC)
        mean = jnp.dot(a, xb, preferred_element_type=jnp.float32).astype(xb.dtype)
        mean_ref[b] = mean
        res_ref[b] = xb - mean                       # res = x - moving_mean (PyTorch order)


# ---------------------------------------------------------------------------
# Averaging matrix (cached, vectorized construction)
# ---------------------------------------------------------------------------
def _build_avg_matrix_np(L, kernel_size):
    """Banded (L, L) matrix encoding AvgPool1d(kernel, stride=1) + replicate padding."""
    p = (kernel_size - 1) // 2
    rows = np.repeat(np.arange(L), kernel_size)
    cols = np.clip(np.arange(L)[:, None] - p + np.arange(kernel_size)[None, :],
                   0, L - 1).reshape(-1)             # replicate padding -> clamp to ends
    counts = np.zeros((L, L), dtype=np.float64)
    np.add.at(counts, (rows, cols), 1.0)             # edge rows collect repeated samples
    return (counts / kernel_size).astype(np.float32)


@functools.lru_cache(maxsize=None)
def _avg_matrix(L, kernel_size, dtype_name):
    # Built once per (L, kernel_size, dtype) and uploaded to HBM once.
    return jnp.asarray(_build_avg_matrix_np(L, kernel_size), dtype=jnp.dtype(dtype_name))


# ---------------------------------------------------------------------------
# Tiling / VMEM heuristics
# ---------------------------------------------------------------------------
_MIN_BLOCK_BYTES = 1 << 20     # ~1 MiB: amortize ~0.35 us per-grid-step overhead
_MAX_BLOCK_BYTES = 4 << 20     # ~4 MiB: keep the double-buffered pipeline in VMEM
_MAX_BATCH_TILE = 16           # bound the static unroll inside the kernel


def _vmem_budget_bytes():
    try:
        cap = int(pltpu.get_tpu_info().vmem_capacity_bytes)   # 64 MiB v7x, 128 MiB v5e/v6e
    except Exception:
        cap = 64 << 20                                         # v7x-safe fallback
    return int(cap * 0.85)                                     # headroom for compiler scratch


def _select_tiling(B, L, C, itemsize, a_bytes, vmem_budget):
    """Pick (batch_tile, channel_tile) so each grid step moves ~1-4 MiB and the
    resident A plus double-buffered x/res/mean blocks fit the VMEM budget."""
    lane_divs = sorted((d for d in range(128, C + 1, 128) if C % d == 0), reverse=True)
    tc_candidates = lane_divs or [C]           # full-C fallback (masked stores)

    def vmem_needed(bb, tc):
        block = bb * L * tc * itemsize
        return a_bytes + 3 * 2 * block         # single-buffered A + 2x (x, res, mean)

    # Largest lane-aligned channel tile whose single-row block stays <= MAX.
    tc = next((d for d in tc_candidates if L * d * itemsize <= _MAX_BLOCK_BYTES),
              tc_candidates[-1])
    # Shrink the channel tile if A + blocks would bust the VMEM budget.
    while vmem_needed(1, tc) > vmem_budget:
        smaller = [d for d in tc_candidates if d < tc]
        if not smaller:
            break
        tc = smaller[0]

    # Fold batch rows into the block until it reaches the ~1 MiB target.
    bb = 1
    for d in sorted(d for d in range(1, min(B, _MAX_BATCH_TILE) + 1) if B % d == 0):
        if (d * L * tc * itemsize <= _MAX_BLOCK_BYTES
                and vmem_needed(d, tc) <= vmem_budget):
            bb = d
            if d * L * tc * itemsize >= _MIN_BLOCK_BYTES:
                break
        else:
            break
    return bb, tc


# ---------------------------------------------------------------------------
# pallas_call wrapper
# ---------------------------------------------------------------------------
def _decomp_call(A, x, bb, tc, vmem_limit, single_buffer_a):
    B, L, C = x.shape
    a_kwargs = {"pipeline_mode": pl.Buffered(1)} if single_buffer_a else {}
    blk = lambda i, j: (i, 0, j)
    return pl.pallas_call(
        _decomp_kernel,
        out_shape=(
            jax.ShapeDtypeStruct((B, L, C), x.dtype),   # res
            jax.ShapeDtypeStruct((B, L, C), x.dtype),   # moving_mean
        ),
        grid=(B // bb, C // tc),
        in_specs=[
            pl.BlockSpec((L, L), lambda i, j: (0, 0), **a_kwargs),   # A, resident
            pl.BlockSpec((bb, L, tc), blk),                          # x
        ],
        out_specs=(
            pl.BlockSpec((bb, L, tc), blk),                          # res
            pl.BlockSpec((bb, L, tc), blk),                          # mean
        ),
        compiler_params=pltpu.CompilerParams(
            dimension_semantics=("parallel", "parallel"),
            vmem_limit_bytes=int(vmem_limit),
        ),
    )(A, x)


def series_decomp2(x, kernel_size):
    """x: (B, L, C). Returns (res, moving_mean), both (B, L, C)."""
    B, L, C = x.shape
    p = (kernel_size - 1) // 2
    # PyTorch's `x - moving_mean` only lines up when lengths match (odd kernel_size).
    assert (L + 2 * p - kernel_size + 1) == L, "series_decomp2 requires odd kernel_size"

    # Native-dtype A: bf16 A for bf16 x feeds the MXU directly (f32 accumulate).
    a_dtype = jnp.bfloat16 if x.dtype == jnp.bfloat16 else jnp.float32
    A = _avg_matrix(L, kernel_size, jnp.dtype(a_dtype).name)

    itemsize = x.dtype.itemsize
    a_bytes = L * L * jnp.dtype(a_dtype).itemsize
    vmem_budget = _vmem_budget_bytes()
    bb, tc = _select_tiling(B, L, C, itemsize, a_bytes, vmem_budget)

    block_bytes = bb * L * tc * itemsize
    needed = 2 * a_bytes + 3 * 2 * block_bytes          # conservative (double-buffered A)
    vmem_limit = min(vmem_budget, max(2 * needed, 32 << 20))

    try:
        # Constant A: single buffer (its block index never changes).
        return _decomp_call(A, x, bb, tc, vmem_limit, single_buffer_a=True)
    except Exception:
        # Fallback for jax versions that reject pl.Buffered(1) on a constant operand.
        return _decomp_call(A, x, bb, tc, vmem_limit, single_buffer_a=False)


# ---------------------------------------------------------------------------
# Pure-JAX reference (mirrors the PyTorch semantics) + self-test
# ---------------------------------------------------------------------------
def _reference(x, kernel_size):
    p = (kernel_size - 1) // 2
    front = jnp.repeat(x[:, 0:1, :], p, axis=1)
    end = jnp.repeat(x[:, -1:, :], p, axis=1)
    xp = jnp.concatenate([front, x, end], axis=1)          # (B, L+2p, C)
    L_out = xp.shape[1] - kernel_size + 1
    windows = jnp.stack([xp[:, j:j + L_out, :] for j in range(kernel_size)], axis=0)
    mean = jnp.mean(windows, axis=0)
    return x - mean, mean


if __name__ == "__main__":
    k1, k2, k3 = jax.random.split(jax.random.PRNGKey(0), 3)

    # Case 1: small, non-lane-aligned C -> full-C blocks, batch rows folded per step.
    x1 = jax.random.normal(k1, (2, 16, 8), dtype=jnp.float32)
    res1, mean1 = series_decomp2(x1, 5)
    jax.block_until_ready((res1, mean1))
    r1, m1 = _reference(x1, 5)
    assert jnp.allclose(res1, r1, atol=1e-5, rtol=1e-5)
    assert jnp.allclose(mean1, m1, atol=1e-5, rtol=1e-5)

    # Case 2: lane-aligned channels (largest lane-aligned divisor of C picked).
    x2 = jax.random.normal(k2, (2, 24, 384), dtype=jnp.float32)
    res2, mean2 = series_decomp2(x2, 25)
    jax.block_until_ready((res2, mean2))
    r2, m2 = _reference(x2, 25)
    assert jnp.allclose(res2, r2, atol=1e-4, rtol=1e-4)
    assert jnp.allclose(mean2, m2, atol=1e-4, rtol=1e-4)

    # Case 3: bf16 input exercising the native bf16 MXU path (bf16 A, f32 accumulate).
    x3 = jax.random.normal(k3, (2, 16, 128), dtype=jnp.bfloat16)
    res3, mean3 = series_decomp2(x3, 7)
    jax.block_until_ready((res3, mean3))
    r3, m3 = _reference(x3.astype(jnp.float32), 7)
    assert jnp.allclose(mean3.astype(jnp.float32), m3, atol=3e-2, rtol=3e-2)
    assert jnp.allclose(res3.astype(jnp.float32), r3, atol=3e-2, rtol=3e-2)

    print("KERNEL_OK")
</pallas_src>

<mosaic_0001>
module attributes {stable_mosaic.version = 11 : i64} {
  func.func @_decomp_kernel(%arg0: i32, %arg1: i32, %arg2: memref<16x16xf32, #tpu.memory_space<vmem>>, %arg3: memref<2x16x8xf32, #tpu.memory_space<vmem>>, %arg4: memref<2x16x8xf32, #tpu.memory_space<vmem>>, %arg5: memref<2x16x8xf32, #tpu.memory_space<vmem>>) attributes {dimension_semantics = [#tpu.dimension_semantics<parallel>, #tpu.dimension_semantics<parallel>], iteration_bounds = array<i64: 1, 1>, scalar_prefetch = 0 : i64, scratch_operands = 0 : i64, tpu.core_type = #tpu.core_type<tc>, window_params = [{pipeline_mode = #tpu.pipeline_mode<synchronous>, transform_indices = @transform_0, window_bounds = array<i64: 16, 16>}, {transform_indices = @transform_1, window_bounds = array<i64: 2, 16, 8>}, {transform_indices = @transform_2, window_bounds = array<i64: 2, 16, 8>}, {transform_indices = @transform_3, window_bounds = array<i64: 2, 16, 8>}]} {
    %c0 = arith.constant 0 : index
    %c0_0 = arith.constant 0 : index
    %0 = vector.load %arg2[%c0, %c0_0] : memref<16x16xf32, #tpu.memory_space<vmem>>, vector<16x16xf32>
    %c0_1 = arith.constant 0 : index
    %c0_2 = arith.constant 0 : index
    %c0_3 = arith.constant 0 : index
    %1 = vector.load %arg3[%c0_1, %c0_2, %c0_3] : memref<2x16x8xf32, #tpu.memory_space<vmem>>, vector<1x16x8xf32>
    %2 = vector.shape_cast %1 : vector<1x16x8xf32> to vector<16x8xf32>
    %cst = arith.constant dense<0.000000e+00> : vector<16x8xf32>
    %3 = tpu.matmul %0, %2, %cst {dimension_numbers = #tpu.dot_dimension_numbers<[1], [0], [0], [1], [0, 0, 1, 1], [], []>} : vector<16x16xf32>, vector<16x8xf32>, vector<16x8xf32> -> vector<16x8xf32>
    %c0_4 = arith.constant 0 : index
    %c0_5 = arith.constant 0 : index
    %c0_6 = arith.constant 0 : index
    %4 = vector.load %arg5[%c0_4, %c0_5, %c0_6] : memref<2x16x8xf32, #tpu.memory_space<vmem>>, vector<1x16x8xf32>
    %5 = vector.shape_cast %4 : vector<1x16x8xf32> to vector<16x8xf32>
    %6 = vector.shape_cast %3 : vector<16x8xf32> to vector<1x16x8xf32>
    tpu.vector_store %arg5[%c0_4, %c0_5, %c0_6], %6 {strides = array<i32>} : memref<2x16x8xf32, #tpu.memory_space<vmem>>, vector<1x16x8xf32>,
    %7 = arith.subf %2, %3 : vector<16x8xf32>
    %c0_7 = arith.constant 0 : index
    %c0_8 = arith.constant 0 : index
    %c0_9 = arith.constant 0 : index
    %8 = vector.load %arg4[%c0_7, %c0_8, %c0_9] : memref<2x16x8xf32, #tpu.memory_space<vmem>>, vector<1x16x8xf32>
    %9 = vector.shape_cast %8 : vector<1x16x8xf32> to vector<16x8xf32>
    %10 = vector.shape_cast %7 : vector<16x8xf32> to vector<1x16x8xf32>
    tpu.vector_store %arg4[%c0_7, %c0_8, %c0_9], %10 {strides = array<i32>} : memref<2x16x8xf32, #tpu.memory_space<vmem>>, vector<1x16x8xf32>,
    %c1 = arith.constant 1 : index
    %c0_10 = arith.constant 0 : index
    %c0_11 = arith.constant 0 : index
    %11 = vector.load %arg3[%c1, %c0_10, %c0_11] : memref<2x16x8xf32, #tpu.memory_space<vmem>>, vector<1x16x8xf32>
    %12 = vector.shape_cast %11 : vector<1x16x8xf32> to vector<16x8xf32>
    %cst_12 = arith.constant dense<0.000000e+00> : vector<16x8xf32>
    %13 = tpu.matmul %0, %12, %cst_12 {dimension_numbers = #tpu.dot_dimension_numbers<[1], [0], [0], [1], [0, 0, 1, 1], [], []>} : vector<16x16xf32>, vector<16x8xf32>, vector<16x8xf32> -> vector<16x8xf32>
    %c1_13 = arith.constant 1 : index
    %c0_14 = arith.constant 0 : index
    %c0_15 = arith.constant 0 : index
    %14 = vector.load %arg5[%c1_13, %c0_14, %c0_15] : memref<2x16x8xf32, #tpu.memory_space<vmem>>, vector<1x16x8xf32>
    %15 = vector.shape_cast %14 : vector<1x16x8xf32> to vector<16x8xf32>
    %16 = vector.shape_cast %13 : vector<16x8xf32> to vector<1x16x8xf32>
    tpu.vector_store %arg5[%c1_13, %c0_14, %c0_15], %16 {strides = array<i32>} : memref<2x16x8xf32, #tpu.memory_space<vmem>>, vector<1x16x8xf32>,
    %17 = arith.subf %12, %13 : vector<16x8xf32>
    %c1_16 = arith.constant 1 : index
    %c0_17 = arith.constant 0 : index
    %c0_18 = arith.constant 0 : index
    %18 = vector.load %arg4[%c1_16, %c0_17, %c0_18] : memref<2x16x8xf32, #tpu.memory_space<vmem>>, vector<1x16x8xf32>
    %19 = vector.shape_cast %18 : vector<1x16x8xf32> to vector<16x8xf32>
    %20 = vector.shape_cast %17 : vector<16x8xf32> to vector<1x16x8xf32>
    tpu.vector_store %arg4[%c1_16, %c0_17, %c0_18], %20 {strides = array<i32>} : memref<2x16x8xf32, #tpu.memory_space<vmem>>, vector<1x16x8xf32>,
    return
  }
  func.func @transform_0(%arg0: i32, %arg1: i32) -> (i32, i32) {
    %c0_i32 = arith.constant 0 : i32
    %c0_i32_0 = arith.constant 0 : i32
    %c0_i32_1 = arith.constant 0 : i32
    return %c0_i32, %c0_i32_0 : i32, i32
  }
  func.func @transform_1(%arg0: i32, %arg1: i32) -> (i32, i32, i32) {
    %c0_i32 = arith.constant 0 : i32
    %c0_i32_0 = arith.constant 0 : i32
    return %arg0, %c0_i32, %arg1 : i32, i32, i32
  }
  func.func @transform_2(%arg0: i32, %arg1: i32) -> (i32, i32, i32) {
    %c0_i32 = arith.constant 0 : i32
    %c0_i32_0 = arith.constant 0 : i32
    return %arg0, %c0_i32, %arg1 : i32, i32, i32
  }
  func.func @transform_3(%arg0: i32, %arg1: i32) -> (i32, i32, i32) {
    %c0_i32 = arith.constant 0 : i32
    %c0_i32_0 = arith.constant 0 : i32
    return %arg0, %c0_i32, %arg1 : i32, i32, i32
  }
}

module attributes {stable_mosaic.version = 11 : i64} {
  func.func @_decomp_kernel(%arg0: i32, %arg1: i32, %arg2: memref<16x16xf32, #tpu.memory_space<vmem>>, %arg3: memref<2x16x8xf32, #tpu.memory_space<vmem>>, %arg4: memref<2x16x8xf32, #tpu.memory_space<vmem>>, %arg5: memref<2x16x8xf32, #tpu.memory_space<vmem>>) attributes {dimension_semantics = [#tpu.dimension_semantics<parallel>, #tpu.dimension_semantics<parallel>], iteration_bounds = array<i64: 1, 1>, scalar_prefetch = 0 : i64, scratch_operands = 0 : i64, tpu.core_type = #tpu.core_type<tc>, window_params = [{pipeline_mode = #tpu.pipeline_mode<synchronous>, transform_indices = @transform_0, window_bounds = array<i64: 16, 16>}, {transform_indices = @transform_1, window_bounds = array<i64: 2, 16, 8>}, {transform_indices = @transform_2, window_bounds = array<i64: 2, 16, 8>}, {transform_indices = @transform_3, window_bounds = array<i64: 2, 16, 8>}]} {
    %c0 = arith.constant 0 : index
    %c0_0 = arith.constant 0 : index
    %0 = vector.load %arg2[%c0, %c0_0] : memref<16x16xf32, #tpu.memory_space<vmem>>, vector<16x16xf32>
    %c0_1 = arith.constant 0 : index
    %c0_2 = arith.constant 0 : index
    %c0_3 = arith.constant 0 : index
    %1 = vector.load %arg3[%c0_1, %c0_2, %c0_3] : memref<2x16x8xf32, #tpu.memory_space<vmem>>, vector<1x16x8xf32>
    %2 = vector.shape_cast %1 : vector<1x16x8xf32> to vector<16x8xf32>
    %cst = arith.constant dense<0.000000e+00> : vector<16x8xf32>
    %3 = tpu.matmul %0, %2, %cst {dimension_numbers = #tpu.dot_dimension_numbers<[1], [0], [0], [1], [0, 0, 1, 1], [], []>} : vector<16x16xf32>, vector<16x8xf32>, vector<16x8xf32> -> vector<16x8xf32>
    %c0_4 = arith.constant 0 : index
    %c0_5 = arith.constant 0 : index
    %c0_6 = arith.constant 0 : index
    %4 = vector.load %arg5[%c0_4, %c0_5, %c0_6] : memref<2x16x8xf32, #tpu.memory_space<vmem>>, vector<1x16x8xf32>
    %5 = vector.shape_cast %4 : vector<1x16x8xf32> to vector<16x8xf32>
    %6 = vector.shape_cast %3 : vector<16x8xf32> to vector<1x16x8xf32>
    tpu.vector_store %arg5[%c0_4, %c0_5, %c0_6], %6 {strides = array<i32>} : memref<2x16x8xf32, #tpu.memory_space<vmem>>, vector<1x16x8xf32>,
    %7 = arith.subf %2, %3 : vector<16x8xf32>
    %c0_7 = arith.constant 0 : index
    %c0_8 = arith.constant 0 : index
    %c0_9 = arith.constant 0 : index
    %8 = vector.load %arg4[%c0_7, %c0_8, %c0_9] : memref<2x16x8xf32, #tpu.memory_space<vmem>>, vector<1x16x8xf32>
    %9 = vector.shape_cast %8 : vector<1x16x8xf32> to vector<16x8xf32>
    %10 = vector.shape_cast %7 : vector<16x8xf32> to vector<1x16x8xf32>
    tpu.vector_store %arg4[%c0_7, %c0_8, %c0_9], %10 {strides = array<i32>} : memref<2x16x8xf32, #tpu.memory_space<vmem>>, vector<1x16x8xf32>,
    %c1 = arith.constant 1 : index
    %c0_10 = arith.constant 0 : index
    %c0_11 = arith.constant 0 : index
    %11 = vector.load %arg3[%c1, %c0_10, %c0_11] : memref<2x16x8xf32, #tpu.memory_space<vmem>>, vector<1x16x8xf32>
    %12 = vector.shape_cast %11 : vector<1x16x8xf32> to vector<16x8xf32>
    %cst_12 = arith.constant dense<0.000000e+00> : vector<16x8xf32>
    %13 = tpu.matmul %0, %12, %cst_12 {dimension_numbers = #tpu.dot_dimension_numbers<[1], [0], [0], [1], [0, 0, 1, 1], [], []>} : vector<16x16xf32>, vector<16x8xf32>, vector<16x8xf32> -> vector<16x8xf32>
    %c1_13 = arith.constant 1 : index
    %c0_14 = arith.constant 0 : index
    %c0_15 = arith.constant 0 : index
    %14 = vector.load %arg5[%c1_13, %c0_14, %c0_15] : memref<2x16x8xf32, #tpu.memory_space<vmem>>, vector<1x16x8xf32>
    %15 = vector.shape_cast %14 : vector<1x16x8xf32> to vector<16x8xf32>
    %16 = vector.shape_cast %13 : vector<16x8xf32> to vector<1x16x8xf32>
    tpu.vector_store %arg5[%c1_13, %c0_14, %c0_15], %16 {strides = array<i32>} : memref<2x16x8xf32, #tpu.memory_space<vmem>>, vector<1x16x8xf32>,
    %17 = arith.subf %12, %13 : vector<16x8xf32>
    %c1_16 = arith.constant 1 : index
    %c0_17 = arith.constant 0 : index
    %c0_18 = arith.constant 0 : index
    %18 = vector.load %arg4[%c1_16, %c0_17, %c0_18] : memref<2x16x8xf32, #tpu.memory_space<vmem>>, vector<1x16x8xf32>
    %19 = vector.shape_cast %18 : vector<1x16x8xf32> to vector<16x8xf32>
    %20 = vector.shape_cast %17 : vector<16x8xf32> to vector<1x16x8xf32>
    tpu.vector_store %arg4[%c1_16, %c0_17, %c0_18], %20 {strides = array<i32>} : memref<2x16x8xf32, #tpu.memory_space<vmem>>, vector<1x16x8xf32>,
    return
  }
  func.func @transform_0(%arg0: i32, %arg1: i32) -> (i32, i32) {
    %c0_i32 = arith.constant 0 : i32
    %c0_i32_0 = arith.constant 0 : i32
    %c0_i32_1 = arith.constant 0 : i32
    return %c0_i32, %c0_i32_0 : i32, i32
  }
  func.func @transform_1(%arg0: i32, %arg1: i32) -> (i32, i32, i32) {
    %c0_i32 = arith.constant 0 : i32
    %c0_i32_0 = arith.constant 0 : i32
    return %arg0, %c0_i32, %arg1 : i32, i32, i32
  }
  func.func @transform_2(%arg0: i32, %arg1: i32) -> (i32, i32, i32) {
    %c0_i32 = arith.constant 0 : i32
    %c0_i32_0 = arith.constant 0 : i32
    return %arg0, %c0_i32, %arg1 : i32, i32, i32
  }
  func.func @transform_3(%arg0: i32, %arg1: i32) -> (i32, i32, i32) {
    %c0_i32 = arith.constant 0 : i32
    %c0_i32_0 = arith.constant 0 : i32
    return %arg0, %c0_i32, %arg1 : i32, i32, i32
  }
}

</mosaic_0001>

<llo_original>
// kernel: tpu_custom_call.1
$region0: #{tpu_custom_call.1}
  #allocation0 [shape = 'u32[]', space=smem, size = 0x4, offset = 0x4, fixed_abs, tag = 'smem constant byte address 0x4 - core index']
  #allocation1 [shape = 'u32[72,128]{1,0:T(1,128)}', space=vmem, size = 0x9000, scoped, tag = 'internal scratch']
  %s0 = inlined_call_operand.vmem [shape: f32[16,16], index: 0, kind: input, shape index: {}]
  %s1 = inlined_call_operand.vmem [shape: f32[2,16,8], index: 1, kind: input, shape index: {}]
  %s2 = inlined_call_operand.vmem [shape: f32[2,16,8], index: 2, kind: output, shape index: {0}]
  %s3 = inlined_call_operand.vmem [shape: f32[2,16,8], index: 3, kind: output, shape index: {1}]
  %4 = xla_tuple %s2, %s3
  %s5 = sld [smem:[#allocation0]]
  $region26: #{tpu_custom_call.1} parent=0
    _
  %s7 = ssub.s32 1, %s5
  %s8 = scalar_select 0, %s7, %s5
  // Predicated region
  $region2: #{tpu_custom_call.1} parent=0 // pred_check
    _
  $region3: #{tpu_custom_call.1} parent=0 // pred_check_branch
    %10 = sbr.rel (0) target = $region5
  $region4: #{tpu_custom_call.1} parent=0 // pred_region
    _
  $region5: #{tpu_custom_call.1} parent=0 // pred_fallthru
    _
  // Predicated region
  $region6: #{tpu_custom_call.1} parent=0 // pred_check
    _
  $region7: #{tpu_custom_call.1} parent=0 // pred_check_branch
    %12 = sbr.rel (0) target = $region9
  $region8: #{tpu_custom_call.1} parent=0 // pred_region
    _
  $region9: #{tpu_custom_call.1} parent=0 // pred_fallthru
    _
  %v13 = vld [vmem:[%s0] sm:$0xff]
  %v14 = vld [vmem:[%s0 + $0x8] sm:$0xff]
  %v15 = vld [vmem:[%s1] sm:$0xff]
  %v16 = vld [vmem:[%s1 + $0x8] sm:$0xff]
  %vm17 = vcmask 130048
  %v19 = vsel %vm17, %v13, 0
  %v22 = vsel %vm17, %v14, 0
  %24 = vmatpush.msra.mxu0 0.0
  %25 = vmatpush.msra.mxu0 0.0
  %26 = vmatpush.msra.mxu0 0.0
  %27 = vmatpush.msra.mxu0 0.0
  %28 = vmatpush.msra.mxu0 0.0
  %29 = vmatpush.msra.mxu0 0.0
  %30 = vmatpush.msra.mxu0 0.0
  %31 = vmatpush.msra.mxu0 0.0
  %32 = vmatpush.msra.mxu0 0.0
  %33 = vmatpush.msra.mxu0 0.0
  %34 = vmatpush.msra.mxu0 0.0
  %35 = vmatpush.msra.mxu0 0.0
  %36 = vmatpush.msra.mxu0 0.0
  %37 = vmatpush.msra.mxu0 0.0
  %38 = vmatpush.msra.mxu0 %v16
  %39 = vmatpush.msra.mxu0 %v15
  %40 = vmatmul.f32.gmra.mxu0 %v19
  %v41 = vpop.f32.mrf.mxu0
  %v42 = vadd.f32 0.0, %v41
  %43 = vmatmul.f32.gmra.mxu0 %v22
  %v44 = vpop.f32.mrf.mxu0
  %v45 = vadd.f32 0.0, %v44
  %46 = vdwg.mxu0
  %vm47 = vcmask 64512
  %48 = vst.msk [vmem:[%s3] sm:$0xff] %vm47, %v42
  %49 = vst.msk [vmem:[%s3 + $0x8] sm:$0xff] %vm47, %v45
  %v50 = vsub.f32 %v15, %v42
  %v51 = vsub.f32 %v16, %v45
  %52 = vst.msk [vmem:[%s2] sm:$0xff] %vm47, %v50
  %53 = vst.msk [vmem:[%s2 + $0x8] sm:$0xff] %vm47, %v51
  %s54 = scalar_lea.vmem %s1, 16
  %v55 = vld [vmem:[%s54] sm:$0xff]
  %v56 = vld [vmem:[%s54 + $0x8] sm:$0xff]
  %57 = vmatpush.msra.mxu0 0.0
  %58 = vmatpush.msra.mxu0 0.0
  %59 = vmatpush.msra.mxu0 0.0
  %60 = vmatpush.msra.mxu0 0.0
  %61 = vmatpush.msra.mxu0 0.0
  %62 = vmatpush.msra.mxu0 0.0
  %63 = vmatpush.msra.mxu0 0.0
  %64 = vmatpush.msra.mxu0 0.0
  %65 = vmatpush.msra.mxu0 0.0
  %66 = vmatpush.msra.mxu0 0.0
  %67 = vmatpush.msra.mxu0 0.0
  %68 = vmatpush.msra.mxu0 0.0
  %69 = vmatpush.msra.mxu0 0.0
  %70 = vmatpush.msra.mxu0 0.0
  %71 = vmatpush.msra.mxu0 %v56
  %72 = vmatpush.msra.mxu0 %v55
  %73 = vmatmul.f32.gmra.mxu0 %v19
  %v74 = vpop.f32.mrf.mxu0
  %v75 = vadd.f32 0.0, %v74
  %76 = vmatmul.f32.gmra.mxu0 %v22
  %v77 = vpop.f32.mrf.mxu0
  %v78 = vadd.f32 0.0, %v77
  %79 = vdwg.mxu0
  %s80 = scalar_lea.vmem %s3, 16
  %81 = vst.msk [vmem:[%s80] sm:$0xff] %vm47, %v75
  %82 = vst.msk [vmem:[%s80 + $0x8] sm:$0xff] %vm47, %v78
  %v83 = vsub.f32 %v55, %v75
  %v84 = vsub.f32 %v56, %v78
  %s85 = scalar_lea.vmem %s2, 16
  %86 = vst.msk [vmem:[%s85] sm:$0xff] %vm47, %v83
  %87 = vst.msk [vmem:[%s85 + $0x8] sm:$0xff] %vm47, %v84
  // Predicated region
  $region10: #{tpu_custom_call.1} parent=0 // pred_check
    _
  $region11: #{tpu_custom_call.1} parent=0 // pred_check_branch
    %89 = sbr.rel (0) target = $region13
  $region12: #{tpu_custom_call.1} parent=0 // pred_region
    _
  $region13: #{tpu_custom_call.1} parent=0 // pred_fallthru
    _
  // Predicated region
  $region14: #{tpu_custom_call.1} parent=0 // pred_check
    _
  $region15: #{tpu_custom_call.1} parent=0 // pred_check_branch
    %91 = sbr.rel (0) target = $region17
  $region16: #{tpu_custom_call.1} parent=0 // pred_region
    _
  $region17: #{tpu_custom_call.1} parent=0 // pred_fallthru
    _
  // Predicated region
  $region18: #{tpu_custom_call.1} parent=0 // pred_check
    _
  $region19: #{tpu_custom_call.1} parent=0 // pred_check_branch
    %93 = sbr.rel (0) target = $region21
  $region20: #{tpu_custom_call.1} parent=0 // pred_region
    _
  $region21: #{tpu_custom_call.1} parent=0 // pred_fallthru
    _
  // Predicated region
  $region22: #{tpu_custom_call.1} parent=0 // pred_check
    _
  $region23: #{tpu_custom_call.1} parent=0 // pred_check_branch
    %95 = sbr.rel (0) target = $region25
  $region24: #{tpu_custom_call.1} parent=0 // pred_region
    _
  $region25: #{tpu_custom_call.1} parent=0 // pred_fallthru
    _

// kernel: tpu_custom_call.1
$region0: #{tpu_custom_call.1}
  #allocation0 [shape = 'u32[]', space=smem, size = 0x4, offset = 0x4, fixed_abs, tag = 'smem constant byte address 0x4 - core index']
  #allocation1 [shape = 'u32[72,128]{1,0:T(1,128)}', space=vmem, size = 0x9000, scoped, tag = 'internal scratch']
  %s0 = inlined_call_operand.vmem [shape: f32[16,16], index: 0, kind: input, shape index: {}]
  %s1 = inlined_call_operand.vmem [shape: f32[2,16,8], index: 1, kind: input, shape index: {}]
  %s2 = inlined_call_operand.vmem [shape: f32[2,16,8], index: 2, kind: output, shape index: {0}]
  %s3 = inlined_call_operand.vmem [shape: f32[2,16,8], index: 3, kind: output, shape index: {1}]
  %4 = xla_tuple %s2, %s3
  %s5 = sld [smem:[#allocation0]]
  $region26: #{tpu_custom_call.1} parent=0
    _
  %s7 = ssub.s32 1, %s5
  %s8 = scalar_select 0, %s7, %s5
  // Predicated region
  $region2: #{tpu_custom_call.1} parent=0 // pred_check
    _
  $region3: #{tpu_custom_call.1} parent=0 // pred_check_branch
    %10 = sbr.rel (0) target = $region5
  $region4: #{tpu_custom_call.1} parent=0 // pred_region
    _
  $region5: #{tpu_custom_call.1} parent=0 // pred_fallthru
    _
  // Predicated region
  $region6: #{tpu_custom_call.1} parent=0 // pred_check
    _
  $region7: #{tpu_custom_call.1} parent=0 // pred_check_branch
    %12 = sbr.rel (0) target = $region9
  $region8: #{tpu_custom_call.1} parent=0 // pred_region
    _
  $region9: #{tpu_custom_call.1} parent=0 // pred_fallthru
    _
  %v13 = vld [vmem:[%s0] sm:$0xff]
  %v14 = vld [vmem:[%s0 + $0x8] sm:$0xff]
  %v15 = vld [vmem:[%s1] sm:$0xff]
  %v16 = vld [vmem:[%s1 + $0x8] sm:$0xff]
  %vm17 = vcmask 130048
  %v19 = vsel %vm17, %v13, 0
  %v22 = vsel %vm17, %v14, 0
  %24 = vmatpush.msra.mxu0 0.0
  %25 = vmatpush.msra.mxu0 0.0
  %26 = vmatpush.msra.mxu0 0.0
  %27 = vmatpush.msra.mxu0 0.0
  %28 = vmatpush.msra.mxu0 0.0
  %29 = vmatpush.msra.mxu0 0.0
  %30 = vmatpush.msra.mxu0 0.0
  %31 = vmatpush.msra.mxu0 0.0
  %32 = vmatpush.msra.mxu0 0.0
  %33 = vmatpush.msra.mxu0 0.0
  %34 = vmatpush.msra.mxu0 0.0
  %35 = vmatpush.msra.mxu0 0.0
  %36 = vmatpush.msra.mxu0 0.0
  %37 = vmatpush.msra.mxu0 0.0
  %38 = vmatpush.msra.mxu0 %v16
  %39 = vmatpush.msra.mxu0 %v15
  %40 = vmatmul.f32.gmra.mxu0 %v19
  %v41 = vpop.f32.mrf.mxu0
  %v42 = vadd.f32 0.0, %v41
  %43 = vmatmul.f32.gmra.mxu0 %v22
  %v44 = vpop.f32.mrf.mxu0
  %v45 = vadd.f32 0.0, %v44
  %46 = vdwg.mxu0
  %vm47 = vcmask 64512
  %48 = vst.msk [vmem:[%s3] sm:$0xff] %vm47, %v42
  %49 = vst.msk [vmem:[%s3 + $0x8] sm:$0xff] %vm47, %v45
  %v50 = vsub.f32 %v15, %v42
  %v51 = vsub.f32 %v16, %v45
  %52 = vst.msk [vmem:[%s2] sm:$0xff] %vm47, %v50
  %53 = vst.msk [vmem:[%s2 + $0x8] sm:$0xff] %vm47, %v51
  %s54 = scalar_lea.vmem %s1, 16
  %v55 = vld [vmem:[%s54] sm:$0xff]
  %v56 = vld [vmem:[%s54 + $0x8] sm:$0xff]
  %57 = vmatpush.msra.mxu0 0.0
  %58 = vmatpush.msra.mxu0 0.0
  %59 = vmatpush.msra.mxu0 0.0
  %60 = vmatpush.msra.mxu0 0.0
  %61 = vmatpush.msra.mxu0 0.0
  %62 = vmatpush.msra.mxu0 0.0
  %63 = vmatpush.msra.mxu0 0.0
  %64 = vmatpush.msra.mxu0 0.0
  %65 = vmatpush.msra.mxu0 0.0
  %66 = vmatpush.msra.mxu0 0.0
  %67 = vmatpush.msra.mxu0 0.0
  %68 = vmatpush.msra.mxu0 0.0
  %69 = vmatpush.msra.mxu0 0.0
  %70 = vmatpush.msra.mxu0 0.0
  %71 = vmatpush.msra.mxu0 %v56
  %72 = vmatpush.msra.mxu0 %v55
  %73 = vmatmul.f32.gmra.mxu0 %v19
  %v74 = vpop.f32.mrf.mxu0
  %v75 = vadd.f32 0.0, %v74
  %76 = vmatmul.f32.gmra.mxu0 %v22
  %v77 = vpop.f32.mrf.mxu0
  %v78 = vadd.f32 0.0, %v77
  %79 = vdwg.mxu0
  %s80 = scalar_lea.vmem %s3, 16
  %81 = vst.msk [vmem:[%s80] sm:$0xff] %vm47, %v75
  %82 = vst.msk [vmem:[%s80 + $0x8] sm:$0xff] %vm47, %v78
  %v83 = vsub.f32 %v55, %v75
  %v84 = vsub.f32 %v56, %v78
  %s85 = scalar_lea.vmem %s2, 16
  %86 = vst.msk [vmem:[%s85] sm:$0xff] %vm47, %v83
  %87 = vst.msk [vmem:[%s85 + $0x8] sm:$0xff] %vm47, %v84
  // Predicated region
  $region10: #{tpu_custom_call.1} parent=0 // pred_check
    _
  $region11: #{tpu_custom_call.1} parent=0 // pred_check_branch
    %89 = sbr.rel (0) target = $region13
  $region12: #{tpu_custom_call.1} parent=0 // pred_region
    _
  $region13: #{tpu_custom_call.1} parent=0 // pred_fallthru
    _
  // Predicated region
  $region14: #{tpu_custom_call.1} parent=0 // pred_check
    _
  $region15: #{tpu_custom_call.1} parent=0 // pred_check_branch
    %91 = sbr.rel (0) target = $region17
  $region16: #{tpu_custom_call.1} parent=0 // pred_region
    _
  $region17: #{tpu_custom_call.1} parent=0 // pred_fallthru
    _
  // Predicated region
  $region18: #{tpu_custom_call.1} parent=0 // pred_check
    _
  $region19: #{tpu_custom_call.1} parent=0 // pred_check_branch
    %93 = sbr.rel (0) target = $region21
  $region20: #{tpu_custom_call.1} parent=0 // pred_region
    _
  $region21: #{tpu_custom_call.1} parent=0 // pred_fallthru
    _
  // Predicated region
  $region22: #{tpu_custom_call.1} parent=0 // pred_check
    _
  $region23: #{tpu_custom_call.1} parent=0 // pred_check_branch
    %95 = sbr.rel (0) target = $region25
  $region24: #{tpu_custom_call.1} parent=0 // pred_region
    _
  $region25: #{tpu_custom_call.1} parent=0 // pred_fallthru
    _

</llo_original>
